<compile_context>
chip_gen: v5e
topology: v5e:2x2
jax: 0.10.0
libtpu: 0.0.40
codegen_flags: <defaults>
</compile_context>

<pallas_src>
import math
import functools

import jax
import jax.numpy as jnp
from jax.experimental import pallas as pl
from jax.experimental.pallas import tpu as pltpu


def _mha_kernel(q_ref, k_ref, v_ref,
                wq_ref, bq_ref, wk_ref, bk_ref, wv_ref, bv_ref,
                wo_ref, bo_ref,
                out_ref, scores_ref,
                *, num_heads, matmul_dtype):
    """One batch element per grid step.

    q_ref/k_ref/v_ref : (1, S, D)       VMEM blocks
    wq/wk/wv_ref      : (H, D, dh)      per-head projection weights (Q weights
                                        pre-scaled by 1/sqrt(dh) on the host)
    bq/bk/bv_ref      : (H, 1, dh)      per-head biases (bq pre-scaled)
    wo_ref            : (H, dh, D)      per-head slices of the output proj
    bo_ref            : (1, D)
    out_ref           : (1, S, D)
    scores_ref        : (1, H, S, S)    pre-softmax scaled logits
    """
    H = num_heads
    f32 = jnp.float32

    def proj(x, w_ref, b_ref):
        # x: (S, D) -> head-batched projection -> (H, S, dh).
        # Broadcasting along a new leading (major) dim keeps the head axis a
        # genuine dot_general batch dim: no lane-splitting reshape/transpose.
        xb = jnp.broadcast_to(x.astype(matmul_dtype), (H,) + x.shape)
        y = jnp.einsum("hsd,hde->hse", xb, w_ref[...],
                       preferred_element_type=f32)
        return y + b_ref[...]

    x_q = q_ref[0]            # (S, D)
    x_k = k_ref[0]
    x_v = v_ref[0]

    qh = proj(x_q, wq_ref, bq_ref)   # (H, S, dh)  -- already scaled by 1/sqrt(dh)
    kh = proj(x_k, wk_ref, bk_ref)   # (H, S, dh)
    vh = proj(x_v, wv_ref, bv_ref)   # (H, S, dh)

    # scores = (Q / sqrt(dh)) @ K^T, one head-batched MXU matmul, no explicit
    # transpose materialized ('hqd,hkd->hqk' contracts the last dims).
    s = jnp.einsum("hqd,hkd->hqk",
                   qh.astype(matmul_dtype), kh.astype(matmul_dtype),
                   preferred_element_type=f32)            # (H, S, S)
    scores_ref[0] = s

    # Numerically-stable softmax; normalization deferred until after PV so the
    # reciprocal-multiply touches O(S*dh) elements instead of O(S^2).
    m = jnp.max(s, axis=-1, keepdims=True)                # (H, S, 1)
    e = jnp.exp(s - m)                                    # (H, S, S)
    denom = jnp.sum(e, axis=-1, keepdims=True)            # (H, S, 1)

    attn = jnp.einsum("hqk,hkd->hqd",
                      e.astype(matmul_dtype), vh.astype(matmul_dtype),
                      preferred_element_type=f32)         # (H, S, dh)
    attn = attn * pl.reciprocal(denom, approx=True)       # EUP slot

    # Output projection folded over heads: sum_h attn_h @ Wo_h + bo.
    # (Replaces the old head_outs list + concatenate.)
    per_head = jnp.einsum("hqd,hde->hqe",
                          attn.astype(matmul_dtype), wo_ref[...],
                          preferred_element_type=f32)     # (H, S, D)
    out_ref[0] = jnp.sum(per_head, axis=0) + bo_ref[...]


def multi_head_attention(Q, K, V, params, *, num_heads, matmul_dtype=None):
    """Pallas wrapper.  Q/K/V: [B, S, D] float32.

    matmul_dtype: optional dtype (e.g. jnp.bfloat16) used for MXU matmul
    operands (f32 accumulation, f32 softmax).  None -> float32 everywhere.
    """
    B, S, D = Q.shape
    assert D % num_heads == 0, "d_model must be divisible by num_heads"
    H = num_heads
    dh = D // H
    md = jnp.dtype(matmul_dtype) if matmul_dtype is not None else jnp.dtype(jnp.float32)
    inv_scale = 1.0 / math.sqrt(dh)

    # Host-side (free) rearrangement of PyTorch-convention (out, in) weights
    # into per-head operands so the kernel never slices/reshapes lanes.
    def split_in_heads(w):                  # (D_out, D_in) -> (H, D_in, dh)
        return jnp.transpose(w.T.reshape(D, H, dh), (1, 0, 2))

    wq = (split_in_heads(params["wq"]) * inv_scale).astype(md)   # fold 1/sqrt(dh)
    wk = split_in_heads(params["wk"]).astype(md)
    wv = split_in_heads(params["wv"]).astype(md)
    wo = params["wo"].T.reshape(H, dh, D).astype(md)             # (H, dh, D)

    bq = (params["bq"].reshape(H, 1, dh) * inv_scale).astype(jnp.float32)
    bk = params["bk"].reshape(H, 1, dh).astype(jnp.float32)
    bv = params["bv"].reshape(H, 1, dh).astype(jnp.float32)
    bo = params["bo"].reshape(1, D).astype(jnp.float32)

    kernel = functools.partial(_mha_kernel, num_heads=H, matmul_dtype=md)

    qkv_spec = pl.BlockSpec((1, S, D), lambda b: (b, 0, 0))
    w_spec = pl.BlockSpec((H, D, dh), lambda b: (0, 0, 0))
    b_spec = pl.BlockSpec((H, 1, dh), lambda b: (0, 0, 0))
    wo_spec = pl.BlockSpec((H, dh, D), lambda b: (0, 0, 0))
    bo_spec = pl.BlockSpec((1, D), lambda b: (0, 0))

    out, scores = pl.pallas_call(
        kernel,
        out_shape=(
            jax.ShapeDtypeStruct((B, S, D), jnp.float32),
            jax.ShapeDtypeStruct((B, H, S, S), jnp.float32),
        ),
        grid_spec=pl.GridSpec(
            grid=(B,),
            in_specs=[
                qkv_spec, qkv_spec, qkv_spec,
                w_spec, b_spec,    # wq, bq (pre-scaled)
                w_spec, b_spec,    # wk, bk
                w_spec, b_spec,    # wv, bv
                wo_spec, bo_spec,  # wo, bo
            ],
            out_specs=(
                pl.BlockSpec((1, S, D), lambda b: (b, 0, 0)),
                pl.BlockSpec((1, H, S, S), lambda b: (b, 0, 0, 0)),
            ),
        ),
        compiler_params=pltpu.CompilerParams(
            dimension_semantics=("parallel",)),
    )(Q, K, V, wq, bq, wk, bk, wv, bv, wo, bo)
    return out, scores


def _reference_mha(Q, K, V, params, *, num_heads):
    """Pure-JAX reference mirroring the PyTorch forward (eval mode, no mask)."""
    B, S, D = Q.shape
    dh = D // num_heads
    scale = math.sqrt(dh)

    def lin(x, w, b):
        return x @ w.T + b

    def split(x):
        return x.reshape(B, S, num_heads, dh).transpose(0, 2, 1, 3)

    qp = split(lin(Q, params["wq"], params["bq"]))
    kp = split(lin(K, params["wk"], params["bk"]))
    vp = split(lin(V, params["wv"], params["bv"]))

    scores = jnp.einsum("bhqd,bhkd->bhqk", qp, kp) / scale
    probs = jax.nn.softmax(scores, axis=-1)
    attn = jnp.einsum("bhqk,bhkd->bhqd", probs, vp)
    combined = attn.transpose(0, 2, 1, 3).reshape(B, S, D)
    out = lin(combined, params["wo"], params["bo"])
    return out, scores


def init_params(key, d_model):
    """Deterministic init: xavier_uniform weights, PyTorch-Linear uniform bias."""
    keys = jax.random.split(key, 8)
    xav = math.sqrt(6.0 / (d_model + d_model))
    bbnd = 1.0 / math.sqrt(d_model)
    p = {}
    for i, name in enumerate(["q", "k", "v", "o"]):
        p["w" + name] = jax.random.uniform(
            keys[2 * i], (d_model, d_model), jnp.float32, -xav, xav)
        p["b" + name] = jax.random.uniform(
            keys[2 * i + 1], (d_model,), jnp.float32, -bbnd, bbnd)
    return p


if __name__ == "__main__":
    B, S, D, H = 2, 8, 32, 4   # batch, seq, d_model, num_heads

    key = jax.random.PRNGKey(0)
    k_p, k_q, k_k, k_v = jax.random.split(key, 4)
    params = init_params(k_p, D)
    Q = jax.random.normal(k_q, (B, S, D), jnp.float32)
    K = jax.random.normal(k_k, (B, S, D), jnp.float32)
    V = jax.random.normal(k_v, (B, S, D), jnp.float32)

    out, scores = multi_head_attention(Q, K, V, params, num_heads=H)
    jax.block_until_ready(out)
    jax.block_until_ready(scores)

    ref_out, ref_scores = _reference_mha(Q, K, V, params, num_heads=H)
    # Scores are pure f32 matmuls (scale folded into Wq) -> tight tolerance.
    assert jnp.allclose(scores, ref_scores, rtol=1e-4, atol=1e-4), "scores mismatch"
    # Output tolerance loosened slightly for the approximate EUP reciprocal in
    # the softmax normalization (pl.reciprocal(..., approx=True)).
    assert jnp.allclose(out, ref_out, rtol=5e-3, atol=5e-3), "output mismatch"

    print("KERNEL_OK")
</pallas_src>

<mosaic_0001>
module attributes {stable_mosaic.version = 11 : i64} {
  func.func @_mha_kernel(%arg0: i32, %arg1: memref<1x8x32xf32, #tpu.memory_space<vmem>>, %arg2: memref<1x8x32xf32, #tpu.memory_space<vmem>>, %arg3: memref<1x8x32xf32, #tpu.memory_space<vmem>>, %arg4: memref<4x32x8xf32, #tpu.memory_space<vmem>>, %arg5: memref<4x1x8xf32, #tpu.memory_space<vmem>>, %arg6: memref<4x32x8xf32, #tpu.memory_space<vmem>>, %arg7: memref<4x1x8xf32, #tpu.memory_space<vmem>>, %arg8: memref<4x32x8xf32, #tpu.memory_space<vmem>>, %arg9: memref<4x1x8xf32, #tpu.memory_space<vmem>>, %arg10: memref<4x8x32xf32, #tpu.memory_space<vmem>>, %arg11: memref<1x32xf32, #tpu.memory_space<vmem>>, %arg12: memref<1x8x32xf32, #tpu.memory_space<vmem>>, %arg13: memref<1x4x8x8xf32, #tpu.memory_space<vmem>>) attributes {dimension_semantics = [#tpu.dimension_semantics<parallel>], iteration_bounds = array<i64: 2>, scalar_prefetch = 0 : i64, scratch_operands = 0 : i64, tpu.core_type = #tpu.core_type<tc>, window_params = [{transform_indices = @transform_0, window_bounds = array<i64: 1, 8, 32>}, {transform_indices = @transform_1, window_bounds = array<i64: 1, 8, 32>}, {transform_indices = @transform_2, window_bounds = array<i64: 1, 8, 32>}, {pipeline_mode = #tpu.pipeline_mode<synchronous>, transform_indices = @transform_3, window_bounds = array<i64: 4, 32, 8>}, {pipeline_mode = #tpu.pipeline_mode<synchronous>, transform_indices = @transform_4, window_bounds = array<i64: 4, 1, 8>}, {pipeline_mode = #tpu.pipeline_mode<synchronous>, transform_indices = @transform_5, window_bounds = array<i64: 4, 32, 8>}, {pipeline_mode = #tpu.pipeline_mode<synchronous>, transform_indices = @transform_6, window_bounds = array<i64: 4, 1, 8>}, {pipeline_mode = #tpu.pipeline_mode<synchronous>, transform_indices = @transform_7, window_bounds = array<i64: 4, 32, 8>}, {pipeline_mode = #tpu.pipeline_mode<synchronous>, transform_indices = @transform_8, window_bounds = array<i64: 4, 1, 8>}, {pipeline_mode = #tpu.pipeline_mode<synchronous>, transform_indices = @transform_9, window_bounds = array<i64: 4, 8, 32>}, {pipeline_mode = #tpu.pipeline_mode<synchronous>, transform_indices = @transform_10, window_bounds = array<i64: 1, 32>}, {transform_indices = @transform_11, window_bounds = array<i64: 1, 8, 32>}, {transform_indices = @transform_12, window_bounds = array<i64: 1, 4, 8, 8>}]} {
    %c0 = arith.constant 0 : index
    %c0_0 = arith.constant 0 : index
    %c0_1 = arith.constant 0 : index
    %0 = vector.load %arg1[%c0, %c0_0, %c0_1] : memref<1x8x32xf32, #tpu.memory_space<vmem>>, vector<1x8x32xf32>
    %1 = vector.shape_cast %0 : vector<1x8x32xf32> to vector<8x32xf32>
    %c0_2 = arith.constant 0 : index
    %c0_3 = arith.constant 0 : index
    %c0_4 = arith.constant 0 : index
    %2 = vector.load %arg2[%c0_2, %c0_3, %c0_4] : memref<1x8x32xf32, #tpu.memory_space<vmem>>, vector<1x8x32xf32>
    %3 = vector.shape_cast %2 : vector<1x8x32xf32> to vector<8x32xf32>
    %c0_5 = arith.constant 0 : index
    %c0_6 = arith.constant 0 : index
    %c0_7 = arith.constant 0 : index
    %4 = vector.load %arg3[%c0_5, %c0_6, %c0_7] : memref<1x8x32xf32, #tpu.memory_space<vmem>>, vector<1x8x32xf32>
    %5 = vector.shape_cast %4 : vector<1x8x32xf32> to vector<8x32xf32>
    %6 = vector.shape_cast %1 : vector<8x32xf32> to vector<1x8x32xf32>
    %7 = vector.broadcast %6 : vector<1x8x32xf32> to vector<4x8x32xf32>
    %c0_8 = arith.constant 0 : index
    %c0_9 = arith.constant 0 : index
    %c0_10 = arith.constant 0 : index
    %8 = vector.load %arg4[%c0_8, %c0_9, %c0_10] : memref<4x32x8xf32, #tpu.memory_space<vmem>>, vector<4x32x8xf32>
    "tpu.trace_start"() <{level = 10 : i32, message = "hsd,hde->hse"}> : () -> ()
    %cst = arith.constant dense<0.000000e+00> : vector<4x8x8xf32>
    %9 = tpu.matmul %7, %8, %cst {dimension_numbers = #tpu.dot_dimension_numbers<[2], [1], [1], [2], [0, 0, 0, 1, 1, 2], [0], [0]>} : vector<4x8x32xf32>, vector<4x32x8xf32>, vector<4x8x8xf32> -> vector<4x8x8xf32>
    "tpu.trace_stop"() : () -> ()
    %c0_11 = arith.constant 0 : index
    %c0_12 = arith.constant 0 : index
    %c0_13 = arith.constant 0 : index
    %10 = vector.load %arg5[%c0_11, %c0_12, %c0_13] : memref<4x1x8xf32, #tpu.memory_space<vmem>>, vector<4x1x8xf32>
    %11 = vector.broadcast %10 : vector<4x1x8xf32> to vector<4x8x8xf32>
    %12 = arith.addf %9, %11 : vector<4x8x8xf32>
    %13 = vector.shape_cast %3 : vector<8x32xf32> to vector<1x8x32xf32>
    %14 = vector.broadcast %13 : vector<1x8x32xf32> to vector<4x8x32xf32>
    %c0_14 = arith.constant 0 : index
    %c0_15 = arith.constant 0 : index
    %c0_16 = arith.constant 0 : index
    %15 = vector.load %arg6[%c0_14, %c0_15, %c0_16] : memref<4x32x8xf32, #tpu.memory_space<vmem>>, vector<4x32x8xf32>
    "tpu.trace_start"() <{level = 10 : i32, message = "hsd,hde->hse"}> : () -> ()
    %cst_17 = arith.constant dense<0.000000e+00> : vector<4x8x8xf32>
    %16 = tpu.matmul %14, %15, %cst_17 {dimension_numbers = #tpu.dot_dimension_numbers<[2], [1], [1], [2], [0, 0, 0, 1, 1, 2], [0], [0]>} : vector<4x8x32xf32>, vector<4x32x8xf32>, vector<4x8x8xf32> -> vector<4x8x8xf32>
    "tpu.trace_stop"() : () -> ()
    %c0_18 = arith.constant 0 : index
    %c0_19 = arith.constant 0 : index
    %c0_20 = arith.constant 0 : index
    %17 = vector.load %arg7[%c0_18, %c0_19, %c0_20] : memref<4x1x8xf32, #tpu.memory_space<vmem>>, vector<4x1x8xf32>
    %18 = vector.broadcast %17 : vector<4x1x8xf32> to vector<4x8x8xf32>
    %19 = arith.addf %16, %18 : vector<4x8x8xf32>
    %20 = vector.shape_cast %5 : vector<8x32xf32> to vector<1x8x32xf32>
    %21 = vector.broadcast %20 : vector<1x8x32xf32> to vector<4x8x32xf32>
    %c0_21 = arith.constant 0 : index
    %c0_22 = arith.constant 0 : index
    %c0_23 = arith.constant 0 : index
    %22 = vector.load %arg8[%c0_21, %c0_22, %c0_23] : memref<4x32x8xf32, #tpu.memory_space<vmem>>, vector<4x32x8xf32>
    "tpu.trace_start"() <{level = 10 : i32, message = "hsd,hde->hse"}> : () -> ()
    %cst_24 = arith.constant dense<0.000000e+00> : vector<4x8x8xf32>
    %23 = tpu.matmul %21, %22, %cst_24 {dimension_numbers = #tpu.dot_dimension_numbers<[2], [1], [1], [2], [0, 0, 0, 1, 1, 2], [0], [0]>} : vector<4x8x32xf32>, vector<4x32x8xf32>, vector<4x8x8xf32> -> vector<4x8x8xf32>
    "tpu.trace_stop"() : () -> ()
    %c0_25 = arith.constant 0 : index
    %c0_26 = arith.constant 0 : index
    %c0_27 = arith.constant 0 : index
    %24 = vector.load %arg9[%c0_25, %c0_26, %c0_27] : memref<4x1x8xf32, #tpu.memory_space<vmem>>, vector<4x1x8xf32>
    %25 = vector.broadcast %24 : vector<4x1x8xf32> to vector<4x8x8xf32>
    %26 = arith.addf %23, %25 : vector<4x8x8xf32>
    "tpu.trace_start"() <{level = 10 : i32, message = "hqd,hkd->hqk"}> : () -> ()
    %cst_28 = arith.constant dense<0.000000e+00> : vector<4x8x8xf32>
    %27 = tpu.matmul %12, %19, %cst_28 {dimension_numbers = #tpu.dot_dimension_numbers<[2], [2], [1], [1], [0, 0, 0, 1, 1, 1], [0], [0]>} : vector<4x8x8xf32>, vector<4x8x8xf32>, vector<4x8x8xf32> -> vector<4x8x8xf32>
    "tpu.trace_stop"() : () -> ()
    %c0_29 = arith.constant 0 : index
    %c0_30 = arith.constant 0 : index
    %c0_31 = arith.constant 0 : index
    %c0_32 = arith.constant 0 : index
    %28 = vector.load %arg13[%c0_29, %c0_30, %c0_31, %c0_32] : memref<1x4x8x8xf32, #tpu.memory_space<vmem>>, vector<1x4x8x8xf32>
    %29 = vector.shape_cast %28 : vector<1x4x8x8xf32> to vector<4x8x8xf32>
    %30 = vector.shape_cast %27 : vector<4x8x8xf32> to vector<1x4x8x8xf32>
    tpu.vector_store %arg13[%c0_29, %c0_30, %c0_31, %c0_32], %30 {strides = array<i32>} : memref<1x4x8x8xf32, #tpu.memory_space<vmem>>, vector<1x4x8x8xf32>,
    %cst_33 = arith.constant dense<0xFF800000> : vector<4x8xf32>
    %31 = vector.multi_reduction <maximumf>, %27, %cst_33 [2] : vector<4x8x8xf32> to vector<4x8xf32>
    %32 = vector.shape_cast %31 : vector<4x8xf32> to vector<4x8x1xf32>
    %33 = vector.broadcast %32 : vector<4x8x1xf32> to vector<4x8x8xf32>
    %34 = arith.subf %27, %33 : vector<4x8x8xf32>
    %35 = math.exp %34 : vector<4x8x8xf32>
    %cst_34 = arith.constant dense<0.000000e+00> : vector<4x8xf32>
    %36 = vector.multi_reduction <add>, %35, %cst_34 [2] : vector<4x8x8xf32> to vector<4x8xf32>
    %37 = vector.shape_cast %36 : vector<4x8xf32> to vector<4x8x1xf32>
    "tpu.trace_start"() <{level = 10 : i32, message = "hqk,hkd->hqd"}> : () -> ()
    %cst_35 = arith.constant dense<0.000000e+00> : vector<4x8x8xf32>
    %38 = tpu.matmul %35, %26, %cst_35 {dimension_numbers = #tpu.dot_dimension_numbers<[2], [1], [1], [2], [0, 0, 0, 1, 1, 2], [0], [0]>} : vector<4x8x8xf32>, vector<4x8x8xf32>, vector<4x8x8xf32> -> vector<4x8x8xf32>
    "tpu.trace_stop"() : () -> ()
    %39 = tpu.reciprocal %37 {approx = true} : vector<4x8x1xf32> -> vector<4x8x1xf32>
    %40 = vector.broadcast %39 : vector<4x8x1xf32> to vector<4x8x8xf32>
    %41 = arith.mulf %38, %40 : vector<4x8x8xf32>
    %c0_36 = arith.constant 0 : index
    %c0_37 = arith.constant 0 : index
    %c0_38 = arith.constant 0 : index
    %42 = vector.load %arg10[%c0_36, %c0_37, %c0_38] : memref<4x8x32xf32, #tpu.memory_space<vmem>>, vector<4x8x32xf32>
    "tpu.trace_start"() <{level = 10 : i32, message = "hqd,hde->hqe"}> : () -> ()
    %cst_39 = arith.constant dense<0.000000e+00> : vector<4x8x32xf32>
    %43 = tpu.matmul %41, %42, %cst_39 {dimension_numbers = #tpu.dot_dimension_numbers<[2], [1], [1], [2], [0, 0, 0, 1, 1, 2], [0], [0]>} : vector<4x8x8xf32>, vector<4x8x32xf32>, vector<4x8x32xf32> -> vector<4x8x32xf32>
    "tpu.trace_stop"() : () -> ()
    %cst_40 = arith.constant dense<0.000000e+00> : vector<8x32xf32>
    %44 = vector.multi_reduction <add>, %43, %cst_40 [0] : vector<4x8x32xf32> to vector<8x32xf32>
    %c0_41 = arith.constant 0 : index
    %c0_42 = arith.constant 0 : index
    %45 = vector.load %arg11[%c0_41, %c0_42] : memref<1x32xf32, #tpu.memory_space<vmem>>, vector<1x32xf32>
    %46 = vector.broadcast %45 : vector<1x32xf32> to vector<8x32xf32>
    %47 = arith.addf %44, %46 : vector<8x32xf32>
    %c0_43 = arith.constant 0 : index
    %c0_44 = arith.constant 0 : index
    %c0_45 = arith.constant 0 : index
    %48 = vector.load %arg12[%c0_43, %c0_44, %c0_45] : memref<1x8x32xf32, #tpu.memory_space<vmem>>, vector<1x8x32xf32>
    %49 = vector.shape_cast %48 : vector<1x8x32xf32> to vector<8x32xf32>
    %50 = vector.shape_cast %47 : vector<8x32xf32> to vector<1x8x32xf32>
    tpu.vector_store %arg12[%c0_43, %c0_44, %c0_45], %50 {strides = array<i32>} : memref<1x8x32xf32, #tpu.memory_space<vmem>>, vector<1x8x32xf32>,
    return
  }
  func.func @transform_0(%arg0: i32) -> (i32, i32, i32) {
    %c0_i32 = arith.constant 0 : i32
    %c0_i32_0 = arith.constant 0 : i32
    %c0_i32_1 = arith.constant 0 : i32
    return %arg0, %c0_i32, %c0_i32_0 : i32, i32, i32
  }
  func.func @transform_1(%arg0: i32) -> (i32, i32, i32) {
    %c0_i32 = arith.constant 0 : i32
    %c0_i32_0 = arith.constant 0 : i32
    %c0_i32_1 = arith.constant 0 : i32
    return %arg0, %c0_i32, %c0_i32_0 : i32, i32, i32
  }
  func.func @transform_2(%arg0: i32) -> (i32, i32, i32) {
    %c0_i32 = arith.constant 0 : i32
    %c0_i32_0 = arith.constant 0 : i32
    %c0_i32_1 = arith.constant 0 : i32
    return %arg0, %c0_i32, %c0_i32_0 : i32, i32, i32
  }
  func.func @transform_3(%arg0: i32) -> (i32, i32, i32) {
    %c0_i32 = arith.constant 0 : i32
    %c0_i32_0 = arith.constant 0 : i32
    %c0_i32_1 = arith.constant 0 : i32
    %c0_i32_2 = arith.constant 0 : i32
    return %c0_i32, %c0_i32_0, %c0_i32_1 : i32, i32, i32
  }
  func.func @transform_4(%arg0: i32) -> (i32, i32, i32) {
    %c0_i32 = arith.constant 0 : i32
    %c0_i32_0 = arith.constant 0 : i32
    %c0_i32_1 = arith.constant 0 : i32
    %c0_i32_2 = arith.constant 0 : i32
    return %c0_i32, %c0_i32_0, %c0_i32_1 : i32, i32, i32
  }
  func.func @transform_5(%arg0: i32) -> (i32, i32, i32) {
    %c0_i32 = arith.constant 0 : i32
    %c0_i32_0 = arith.constant 0 : i32
    %c0_i32_1 = arith.constant 0 : i32
    %c0_i32_2 = arith.constant 0 : i32
    return %c0_i32, %c0_i32_0, %c0_i32_1 : i32, i32, i32
  }
  func.func @transform_6(%arg0: i32) -> (i32, i32, i32) {
    %c0_i32 = arith.constant 0 : i32
    %c0_i32_0 = arith.constant 0 : i32
    %c0_i32_1 = arith.constant 0 : i32
    %c0_i32_2 = arith.constant 0 : i32
    return %c0_i32, %c0_i32_0, %c0_i32_1 : i32, i32, i32
  }
  func.func @transform_7(%arg0: i32) -> (i32, i32, i32) {
    %c0_i32 = arith.constant 0 : i32
    %c0_i32_0 = arith.constant 0 : i32
    %c0_i32_1 = arith.constant 0 : i32
    %c0_i32_2 = arith.constant 0 : i32
    return %c0_i32, %c0_i32_0, %c0_i32_1 : i32, i32, i32
  }
  func.func @transform_8(%arg0: i32) -> (i32, i32, i32) {
    %c0_i32 = arith.constant 0 : i32
    %c0_i32_0 = arith.constant 0 : i32
    %c0_i32_1 = arith.constant 0 : i32
    %c0_i32_2 = arith.constant 0 : i32
    return %c0_i32, %c0_i32_0, %c0_i32_1 : i32, i32, i32
  }
  func.func @transform_9(%arg0: i32) -> (i32, i32, i32) {
    %c0_i32 = arith.constant 0 : i32
    %c0_i32_0 = arith.constant 0 : i32
    %c0_i32_1 = arith.constant 0 : i32
    %c0_i32_2 = arith.constant 0 : i32
    return %c0_i32, %c0_i32_0, %c0_i32_1 : i32, i32, i32
  }
  func.func @transform_10(%arg0: i32) -> (i32, i32) {
    %c0_i32 = arith.constant 0 : i32
    %c0_i32_0 = arith.constant 0 : i32
    %c0_i32_1 = arith.constant 0 : i32
    return %c0_i32, %c0_i32_0 : i32, i32
  }
  func.func @transform_11(%arg0: i32) -> (i32, i32, i32) {
    %c0_i32 = arith.constant 0 : i32
    %c0_i32_0 = arith.constant 0 : i32
    %c0_i32_1 = arith.constant 0 : i32
    return %arg0, %c0_i32, %c0_i32_0 : i32, i32, i32
  }
  func.func @transform_12(%arg0: i32) -> (i32, i32, i32, i32) {
    %c0_i32 = arith.constant 0 : i32
    %c0_i32_0 = arith.constant 0 : i32
    %c0_i32_1 = arith.constant 0 : i32
    %c0_i32_2 = arith.constant 0 : i32
    return %arg0, %c0_i32, %c0_i32_0, %c0_i32_1 : i32, i32, i32, i32
  }
}

</mosaic_0001>

<llo_original>
// kernel: tpu_custom_call.1
$region0: #{tpu_custom_call.1}
  #allocation0 [shape = 'u32[]', space=smem, size = 0x4, offset = 0x4, fixed_abs, tag = 'smem constant byte address 0x4 - core index']
  #allocation1 [shape = 'u32[72,128]{1,0:T(1,128)}', space=vmem, size = 0x9000, scoped, tag = 'internal scratch']
  %s0 = inlined_call_operand.vmem [shape: f32[2,8,32], index: 0, kind: input, shape index: {}]
  %s1 = inlined_call_operand.vmem [shape: f32[2,8,32], index: 1, kind: input, shape index: {}]
  %s2 = inlined_call_operand.vmem [shape: f32[2,8,32], index: 2, kind: input, shape index: {}]
  %s3 = inlined_call_operand.vmem [shape: f32[4,32,8], index: 3, kind: input, shape index: {}]
  %s4 = inlined_call_operand.vmem [shape: f32[4,1,8], index: 4, kind: input, shape index: {}]
  %s5 = inlined_call_operand.vmem [shape: f32[4,32,8], index: 5, kind: input, shape index: {}]
  %s6 = inlined_call_operand.vmem [shape: f32[4,1,8], index: 6, kind: input, shape index: {}]
  %s7 = inlined_call_operand.vmem [shape: f32[4,32,8], index: 7, kind: input, shape index: {}]
  %s8 = inlined_call_operand.vmem [shape: f32[4,1,8], index: 8, kind: input, shape index: {}]
  %s9 = inlined_call_operand.vmem [shape: f32[4,8,32], index: 9, kind: input, shape index: {}]
  %s10 = inlined_call_operand.vmem [shape: f32[1,32], index: 10, kind: input, shape index: {}]
  %s11 = inlined_call_operand.hbm [shape: f32[2,8,32], index: 11, kind: output, shape index: {0}]
  %s12 = inlined_call_operand.hbm [shape: f32[2,4,8,8], index: 12, kind: output, shape index: {1}]
  %13 = xla_tuple %s11, %s12
  %s14 = sld [smem:[#allocation0]]
  $region85: #{tpu_custom_call.1} parent=0
    _
  %s16 = ssub.s32 1, %s14
  %s17 = scalar_select 0, %s16, %s14
  $region1: #{tpu_custom_call.1} parent=0
    #allocation2 [shape = 'u8[8192]{0}', space=vmem, size = 0x2000, scoped, tag = 'output window, operand 0']
    #allocation3 [shape = 's32[2]{0}', space=sflag, size = 0x8, scoped, tag = 'scoped memory for tpu_custom_call.1']
    #allocation4 [shape = 'u8[32768]{0}', space=vmem, size = 0x8000, scoped, tag = 'output window, operand 1']
    #allocation5 [shape = 's32[2]{0}', space=sflag, size = 0x8, scoped, tag = 'scoped memory for tpu_custom_call.1']
    %18 = vsyncpa [#allocation3], 0
    %s19 = scalar_lea.sflag [#allocation3], 1
    %20 = vsyncpa %s19, 0
    %21 = vsyncpa [#allocation5], 0
    %s22 = scalar_lea.sflag [#allocation5], 1
    %23 = vsyncpa %s22, 0
    loop: start=0, step=1, limit=4
    $region2: #{tpu_custom_call.1} parent=1 // loop_pre_header
      _
    $region3: #{tpu_custom_call.1} parent=1 // loop_header
      %s25 = sphi 0, %s29
      %p26 = scmp.ge.s32.totalorder %s25, 4
      %s35 = sphi 0, %s37
      %s38 = sphi 0, %s35
      %s39 = sphi 0, %s38
      %s55 = sphi 0, %s39
      %s61 = sphi 0, %s63
      %s64 = sphi 0, %s61
      %s65 = sphi 0, %s64
      %s81 = sphi 0, %s65
      %s87 = sphi 0, %s89
      %s90 = sphi 0, %s87
      %s91 = sphi 0, %s90
      %s107 = sphi 0, %s91
      %s111 = sphi 0, %s111
      %s113 = sphi 0, %s111
      %s114 = sphi 0, %s113
      %s128 = sphi 0, %s114
      %s132 = sphi 0, %s132
      %s134 = sphi 0, %s132
      %s135 = sphi 0, %s134
      %s149 = sphi 0, %s135
      %s153 = sphi 0, %s153
      %s155 = sphi 0, %s153
      %s156 = sphi 0, %s155
      %s170 = sphi 0, %s156
      %s174 = sphi 0, %s174
      %s176 = sphi 0, %s174
      %s177 = sphi 0, %s176
      %s191 = sphi 0, %s177
      %s195 = sphi 0, %s195
      %s197 = sphi 0, %s195
      %s198 = sphi 0, %s197
      %s212 = sphi 0, %s198
      %s216 = sphi 0, %s216
      %s218 = sphi 0, %s216
      %s219 = sphi 0, %s218
      %s233 = sphi 0, %s219
      %s237 = sphi 0, %s237
      %s239 = sphi 0, %s237
      %s240 = sphi 0, %s239
      %s254 = sphi 0, %s240
      %s258 = sphi 0, %s258
      %s260 = sphi 0, %s258
      %s261 = sphi 0, %s260
      %s275 = sphi 0, %s261
      %s281 = sphi 0, %s283
      %s284 = sphi 0, %s281
      %s285 = sphi 0, %s284
      %s301 = sphi 0, %s285
      %s307 = sphi 0, %s309
      %s310 = sphi 0, %s307
      %s311 = sphi 0, %s310
      %s327 = sphi 0, %s311
    $region4: #{tpu_custom_call.1} parent=1 // loop_header_branch
      %28 = sbr.rel (%p26) target = $region8
    $region5: #{tpu_custom_call.1} parent=1 // loop_body
      %s30 = ssub.s32 %s25, 1
      %s31 = ssub.s32 %s25, 2
      %s32 = sadd.s32 %s25, 1
      %s33 = ssub.s32 %s25, %s32
      %p34 = scmp.eq.s32.totalorder %s33, 0
      %s36 = sadd.s32 %s35, 1
      %s37 = scalar_select %p34, %s35, %s36
      %p40 = pneg %p34
      %p41 = scmp.eq.s32.totalorder %s25, 1
      %p42 = por %p40, %p41
      %p43 = scmp.ne.s32.totalorder %s35, %s38
      %p44 = scmp.eq.s32.totalorder %s25, 0
      %p45 = por %p43, %p44
      %p46 = scmp.ne.s32.totalorder %s35, %s38
      %p47 = scmp.eq.s32.totalorder %s30, 1
      %p48 = por %p46, %p47
      %p49 = scmp.ne.s32.totalorder %s38, %s39
      %p50 = scmp.eq.s32.totalorder %s30, 0
      %p51 = por %p49, %p50
      %p52 = scmp.ne.s32.totalorder %s38, %s39
      %p53 = scmp.eq.s32.totalorder %s31, 1
      %p54 = por %p52, %p53
      %p56 = scmp.ne.s32.totalorder %s39, %s55
      %p57 = scmp.eq.s32.totalorder %s31, 0
      %p58 = por %p56, %p57
      %s59 = ssub.s32 %s25, %s32
      %p60 = scmp.eq.s32.totalorder %s59, 0
      %s62 = sadd.s32 %s61, 1
      %s63 = scalar_select %p60, %s61, %s62
      %p66 = pneg %p60
      %p67 = scmp.eq.s32.totalorder %s25, 1
      %p68 = por %p66, %p67
      %p69 = scmp.ne.s32.totalorder %s61, %s64
      %p70 = scmp.eq.s32.totalorder %s25, 0
      %p71 = por %p69, %p70
      %p72 = scmp.ne.s32.totalorder %s61, %s64
      %p73 = scmp.eq.s32.totalorder %s30, 1
      %p74 = por %p72, %p73
      %p75 = scmp.ne.s32.totalorder %s64, %s65
      %p76 = scmp.eq.s32.totalorder %s30, 0
      %p77 = por %p75, %p76
      %p78 = scmp.ne.s32.totalorder %s64, %s65
      %p79 = scmp.eq.s32.totalorder %s31, 1
      %p80 = por %p78, %p79
      %p82 = scmp.ne.s32.totalorder %s65, %s81
      %p83 = scmp.eq.s32.totalorder %s31, 0
      %p84 = por %p82, %p83
      %s85 = ssub.s32 %s25, %s32
      %p86 = scmp.eq.s32.totalorder %s85, 0
      %s88 = sadd.s32 %s87, 1
      %s89 = scalar_select %p86, %s87, %s88
      %p92 = pneg %p86
      %p93 = scmp.eq.s32.totalorder %s25, 1
      %p94 = por %p92, %p93
      %p95 = scmp.ne.s32.totalorder %s87, %s90
      %p96 = scmp.eq.s32.totalorder %s25, 0
      %p97 = por %p95, %p96
      %p98 = scmp.ne.s32.totalorder %s87, %s90
      %p99 = scmp.eq.s32.totalorder %s30, 1
      %p100 = por %p98, %p99
      %p101 = scmp.ne.s32.totalorder %s90, %s91
      %p102 = scmp.eq.s32.totalorder %s30, 0
      %p103 = por %p101, %p102
      %p104 = scmp.ne.s32.totalorder %s90, %s91
      %p105 = scmp.eq.s32.totalorder %s31, 1
      %p106 = por %p104, %p105
      %p108 = scmp.ne.s32.totalorder %s91, %s107
      %p109 = scmp.eq.s32.totalorder %s31, 0
      %p110 = por %p108, %p109
      %s112 = sadd.s32 %s111, 1
      %p115 = scmp.eq.s32.totalorder %s25, 1
      %p116 = scmp.ne.s32.totalorder %s111, %s113
      %p117 = scmp.eq.s32.totalorder %s25, 0
      %p118 = por %p116, %p117
      %p119 = scmp.ne.s32.totalorder %s111, %s113
      %p120 = scmp.eq.s32.totalorder %s30, 1
      %p121 = por %p119, %p120
      %p122 = scmp.ne.s32.totalorder %s113, %s114
      %p123 = scmp.eq.s32.totalorder %s30, 0
      %p124 = por %p122, %p123
      %p125 = scmp.ne.s32.totalorder %s113, %s114
      %p126 = scmp.eq.s32.totalorder %s31, 1
      %p127 = por %p125, %p126
      %p129 = scmp.ne.s32.totalorder %s114, %s128
      %p130 = scmp.eq.s32.totalorder %s31, 0
      %p131 = por %p129, %p130
      %s133 = sadd.s32 %s132, 1
      %p136 = scmp.eq.s32.totalorder %s25, 1
      %p137 = scmp.ne.s32.totalorder %s132, %s134
      %p138 = scmp.eq.s32.totalorder %s25, 0
      %p139 = por %p137, %p138
      %p140 = scmp.ne.s32.totalorder %s132, %s134
      %p141 = scmp.eq.s32.totalorder %s30, 1
      %p142 = por %p140, %p141
      %p143 = scmp.ne.s32.totalorder %s134, %s135
      %p144 = scmp.eq.s32.totalorder %s30, 0
      %p145 = por %p143, %p144
      %p146 = scmp.ne.s32.totalorder %s134, %s135
      %p147 = scmp.eq.s32.totalorder %s31, 1
      %p148 = por %p146, %p147
      %p150 = scmp.ne.s32.totalorder %s135, %s149
      %p151 = scmp.eq.s32.totalorder %s31, 0
      %p152 = por %p150, %p151
      %s154 = sadd.s32 %s153, 1
      %p157 = scmp.eq.s32.totalorder %s25, 1
      %p158 = scmp.ne.s32.totalorder %s153, %s155
      %p159 = scmp.eq.s32.totalorder %s25, 0
      %p160 = por %p158, %p159
      %p161 = scmp.ne.s32.totalorder %s153, %s155
      %p162 = scmp.eq.s32.totalorder %s30, 1
      %p163 = por %p161, %p162
      %p164 = scmp.ne.s32.totalorder %s155, %s156
      %p165 = scmp.eq.s32.totalorder %s30, 0
      %p166 = por %p164, %p165
      %p167 = scmp.ne.s32.totalorder %s155, %s156
      %p168 = scmp.eq.s32.totalorder %s31, 1
      %p169 = por %p167, %p168
      %p171 = scmp.ne.s32.totalorder %s156, %s170
      %p172 = scmp.eq.s32.totalorder %s31, 0
      %p173 = por %p171, %p172
      %s175 = sadd.s32 %s174, 1
      %p178 = scmp.eq.s32.totalorder %s25, 1
      %p179 = scmp.ne.s32.totalorder %s174, %s176
      %p180 = scmp.eq.s32.totalorder %s25, 0
      %p181 = por %p179, %p180
      %p182 = scmp.ne.s32.totalorder %s174, %s176
      %p183 = scmp.eq.s32.totalorder %s30, 1
      %p184 = por %p182, %p183
      %p185 = scmp.ne.s32.totalorder %s176, %s177
      %p186 = scmp.eq.s32.totalorder %s30, 0
      %p187 = por %p185, %p186
      %p188 = scmp.ne.s32.totalorder %s176, %s177
      %p189 = scmp.eq.s32.totalorder %s31, 1
      %p190 = por %p188, %p189
      %p192 = scmp.ne.s32.totalorder %s177, %s191
      %p193 = scmp.eq.s32.totalorder %s31, 0
      %p194 = por %p192, %p193
      %s196 = sadd.s32 %s195, 1
      %p199 = scmp.eq.s32.totalorder %s25, 1
      %p200 = scmp.ne.s32.totalorder %s195, %s197
      %p201 = scmp.eq.s32.totalorder %s25, 0
      %p202 = por %p200, %p201
      %p203 = scmp.ne.s32.totalorder %s195, %s197
      %p204 = scmp.eq.s32.totalorder %s30, 1
      %p205 = por %p203, %p204
      %p206 = scmp.ne.s32.totalorder %s197, %s198
      %p207 = scmp.eq.s32.totalorder %s30, 0
      %p208 = por %p206, %p207
      %p209 = scmp.ne.s32.totalorder %s197, %s198
      %p210 = scmp.eq.s32.totalorder %s31, 1
      %p211 = por %p209, %p210
      %p213 = scmp.ne.s32.totalorder %s198, %s212
      %p214 = scmp.eq.s32.totalorder %s31, 0
      %p215 = por %p213, %p214
      %s217 = sadd.s32 %s216, 1
      %p220 = scmp.eq.s32.totalorder %s25, 1
      %p221 = scmp.ne.s32.totalorder %s216, %s218
      %p222 = scmp.eq.s32.totalorder %s25, 0
      %p223 = por %p221, %p222
      %p224 = scmp.ne.s32.totalorder %s216, %s218
      %p225 = scmp.eq.s32.totalorder %s30, 1
      %p226 = por %p224, %p225
      %p227 = scmp.ne.s32.totalorder %s218, %s219
      %p228 = scmp.eq.s32.totalorder %s30, 0
      %p229 = por %p227, %p228
      %p230 = scmp.ne.s32.totalorder %s218, %s219
      %p231 = scmp.eq.s32.totalorder %s31, 1
      %p232 = por %p230, %p231
      %p234 = scmp.ne.s32.totalorder %s219, %s233
      %p235 = scmp.eq.s32.totalorder %s31, 0
      %p236 = por %p234, %p235
      %s238 = sadd.s32 %s237, 1
      %p241 = scmp.eq.s32.totalorder %s25, 1
      %p242 = scmp.ne.s32.totalorder %s237, %s239
      %p243 = scmp.eq.s32.totalorder %s25, 0
      %p244 = por %p242, %p243
      %p245 = scmp.ne.s32.totalorder %s237, %s239
      %p246 = scmp.eq.s32.totalorder %s30, 1
      %p247 = por %p245, %p246
      %p248 = scmp.ne.s32.totalorder %s239, %s240
      %p249 = scmp.eq.s32.totalorder %s30, 0
      %p250 = por %p248, %p249
      %p251 = scmp.ne.s32.totalorder %s239, %s240
      %p252 = scmp.eq.s32.totalorder %s31, 1
      %p253 = por %p251, %p252
      %p255 = scmp.ne.s32.totalorder %s240, %s254
      %p256 = scmp.eq.s32.totalorder %s31, 0
      %p257 = por %p255, %p256
      %s259 = sadd.s32 %s258, 1
      %p262 = scmp.eq.s32.totalorder %s25, 1
      %p263 = scmp.ne.s32.totalorder %s258, %s260
      %p264 = scmp.eq.s32.totalorder %s25, 0
      %p265 = por %p263, %p264
      %p266 = scmp.ne.s32.totalorder %s258, %s260
      %p267 = scmp.eq.s32.totalorder %s30, 1
      %p268 = por %p266, %p267
      %p269 = scmp.ne.s32.totalorder %s260, %s261
      %p270 = scmp.eq.s32.totalorder %s30, 0
      %p271 = por %p269, %p270
      %p272 = scmp.ne.s32.totalorder %s260, %s261
      %p273 = scmp.eq.s32.totalorder %s31, 1
      %p274 = por %p272, %p273
      %p276 = scmp.ne.s32.totalorder %s261, %s275
      %p277 = scmp.eq.s32.totalorder %s31, 0
      %p278 = por %p276, %p277
      %s279 = ssub.s32 %s25, %s32
      %p280 = scmp.eq.s32.totalorder %s279, 0
      %s282 = sadd.s32 %s281, 1
      %s283 = scalar_select %p280, %s281, %s282
      %p286 = pneg %p280
      %p287 = scmp.eq.s32.totalorder %s25, 1
      %p288 = por %p286, %p287
      %p289 = scmp.ne.s32.totalorder %s281, %s284
      %p290 = scmp.eq.s32.totalorder %s25, 0
      %p291 = por %p289, %p290
      %p292 = scmp.ne.s32.totalorder %s281, %s284
      %p293 = scmp.eq.s32.totalorder %s30, 1
      %p294 = por %p292, %p293
      %p295 = scmp.ne.s32.totalorder %s284, %s285
      %p296 = scmp.eq.s32.totalorder %s30, 0
      %p297 = por %p295, %p296
      %p298 = scmp.ne.s32.totalorder %s284, %s285
      %p299 = scmp.eq.s32.totalorder %s31, 1
      %p300 = por %p298, %p299
      %p302 = scmp.ne.s32.totalorder %s285, %s301
      %p303 = scmp.eq.s32.totalorder %s31, 0
      %p304 = por %p302, %p303
      %s305 = ssub.s32 %s25, %s32
      %p306 = scmp.eq.s32.totalorder %s305, 0
      %s308 = sadd.s32 %s307, 1
      %s309 = scalar_select %p306, %s307, %s308
      %p312 = pneg %p306
      %p313 = scmp.eq.s32.totalorder %s25, 1
      %p314 = por %p312, %p313
      %p315 = scmp.ne.s32.totalorder %s307, %s310
      %p316 = scmp.eq.s32.totalorder %s25, 0
      %p317 = por %p315, %p316
      %p318 = scmp.ne.s32.totalorder %s307, %s310
      %p319 = scmp.eq.s32.totalorder %s30, 1
      %p320 = por %p318, %p319
      %p321 = scmp.ne.s32.totalorder %s310, %s311
      %p322 = scmp.eq.s32.totalorder %s30, 0
      %p323 = por %p321, %p322
      %p324 = scmp.ne.s32.totalorder %s310, %s311
      %p325 = scmp.eq.s32.totalorder %s31, 1
      %p326 = por %p324, %p325
      %p328 = scmp.ne.s32.totalorder %s311, %s327
      %p329 = scmp.eq.s32.totalorder %s31, 0
      %p330 = por %p328, %p329
      %p331 = scmp.le.s32.totalorder 1, %s25
      %p332 = scmp.lt.s32.totalorder %s25, 3
      %p333 = pnand %p331, %p332
      %p334 = pneg %p333
      // Predicated region
      $region9: #{tpu_custom_call.1} parent=5 // pred_check
        _
      $region10: #{tpu_custom_call.1} parent=5 // pred_check_branch
        %336 = sbr.rel (%p333) target = $region12
      $region11: #{tpu_custom_call.1} parent=5 // pred_region
        %s337 = ssub.s32 %s25, 1
        // Predicated region
        $region13: #{tpu_custom_call.1} parent=11 // pred_check
          %p338 = pneg %p124
        $region14: #{tpu_custom_call.1} parent=11 // pred_check_branch
          %340 = sbr.rel (%p338) target = $region16
        $region15: #{tpu_custom_call.1} parent=11 // pred_region
          _
        $region16: #{tpu_custom_call.1} parent=11 // pred_fallthru
          _
        // Predicated region
        $region17: #{tpu_custom_call.1} parent=11 // pred_check
          %p341 = pneg %p145
        $region18: #{tpu_custom_call.1} parent=11 // pred_check_branch
          %343 = sbr.rel (%p341) target = $region20
        $region19: #{tpu_custom_call.1} parent=11 // pred_region
          _
        $region20: #{tpu_custom_call.1} parent=11 // pred_fallthru
          _
        // Predicated region
        $region21: #{tpu_custom_call.1} parent=11 // pred_check
          %p344 = pneg %p166
        $region22: #{tpu_custom_call.1} parent=11 // pred_check_branch
          %346 = sbr.rel (%p344) target = $region24
        $region23: #{tpu_custom_call.1} parent=11 // pred_region
          _
        $region24: #{tpu_custom_call.1} parent=11 // pred_fallthru
          _
        // Predicated region
        $region25: #{tpu_custom_call.1} parent=11 // pred_check
          %p347 = pneg %p187
        $region26: #{tpu_custom_call.1} parent=11 // pred_check_branch
          %349 = sbr.rel (%p347) target = $region28
        $region27: #{tpu_custom_call.1} parent=11 // pred_region
          _
        $region28: #{tpu_custom_call.1} parent=11 // pred_fallthru
          _
        // Predicated region
        $region29: #{tpu_custom_call.1} parent=11 // pred_check
          %p350 = pneg %p208
        $region30: #{tpu_custom_call.1} parent=11 // pred_check_branch
          %352 = sbr.rel (%p350) target = $region32
        $region31: #{tpu_custom_call.1} parent=11 // pred_region
          _
        $region32: #{tpu_custom_call.1} parent=11 // pred_fallthru
          _
        // Predicated region
        $region33: #{tpu_custom_call.1} parent=11 // pred_check
          %p353 = pneg %p229
        $region34: #{tpu_custom_call.1} parent=11 // pred_check_branch
          %355 = sbr.rel (%p353) target = $region36
        $region35: #{tpu_custom_call.1} parent=11 // pred_region
          _
        $region36: #{tpu_custom_call.1} parent=11 // pred_fallthru
          _
        // Predicated region
        $region37: #{tpu_custom_call.1} parent=11 // pred_check
          %p356 = pneg %p250
        $region38: #{tpu_custom_call.1} parent=11 // pred_check_branch
          %358 = sbr.rel (%p356) target = $region40
        $region39: #{tpu_custom_call.1} parent=11 // pred_region
          _
        $region40: #{tpu_custom_call.1} parent=11 // pred_fallthru
          _
        // Predicated region
        $region41: #{tpu_custom_call.1} parent=11 // pred_check
          %p359 = pneg %p271
        $region42: #{tpu_custom_call.1} parent=11 // pred_check_branch
          %361 = sbr.rel (%p359) target = $region44
        $region43: #{tpu_custom_call.1} parent=11 // pred_region
          _
        $region44: #{tpu_custom_call.1} parent=11 // pred_fallthru
          _
      $region12: #{tpu_custom_call.1} parent=5 // pred_fallthru
        _
      %p362 = scmp.lt.s32.totalorder %s25, 2
      // Predicated region
      $region45: #{tpu_custom_call.1} parent=5 // pred_check
        %p363 = pneg %p362
      $region46: #{tpu_custom_call.1} parent=5 // pred_check_branch
        %365 = sbr.rel (%p363) target = $region48
      $region47: #{tpu_custom_call.1} parent=5 // pred_region
        // Predicated region
        $region49: #{tpu_custom_call.1} parent=47 // pred_check
          %p366 = pneg %p45
        $region50: #{tpu_custom_call.1} parent=47 // pred_check_branch
          %368 = sbr.rel (%p366) target = $region52
        $region51: #{tpu_custom_call.1} parent=47 // pred_region
          %p369 = scmp.lt.s32.totalorder %s25, 1
          %s370 = scalar_select %p369, %s25, 1
          %s371 = smul.addr %s370, 8
          %s372 = scalar_lea.vmem %s0, %s371
        $region52: #{tpu_custom_call.1} parent=47 // pred_fallthru
          _
        // Predicated region
        $region53: #{tpu_custom_call.1} parent=47 // pred_check
          %p373 = pneg %p71
        $region54: #{tpu_custom_call.1} parent=47 // pred_check_branch
          %375 = sbr.rel (%p373) target = $region56
        $region55: #{tpu_custom_call.1} parent=47 // pred_region
          %p376 = scmp.lt.s32.totalorder %s25, 1
          %s377 = scalar_select %p376, %s25, 1
          %s378 = smul.addr %s377, 8
          %s379 = scalar_lea.vmem %s1, %s378
        $region56: #{tpu_custom_call.1} parent=47 // pred_fallthru
          _
        // Predicated region
        $region57: #{tpu_custom_call.1} parent=47 // pred_check
          %p380 = pneg %p97
        $region58: #{tpu_custom_call.1} parent=47 // pred_check_branch
          %382 = sbr.rel (%p380) target = $region60
        $region59: #{tpu_custom_call.1} parent=47 // pred_region
          %p383 = scmp.lt.s32.totalorder %s25, 1
          %s384 = scalar_select %p383, %s25, 1
          %s385 = smul.addr %s384, 8
          %s386 = scalar_lea.vmem %s2, %s385
        $region60: #{tpu_custom_call.1} parent=47 // pred_fallthru
          _
      $region48: #{tpu_custom_call.1} parent=5 // pred_fallthru
        _
      %p387 = scmp.le.s32.totalorder 1, %s25
      %p388 = scmp.lt.s32.totalorder %s25, 3
      %p389 = pnand %p387, %p388
      %p390 = pneg %p389
      // Predicated region
      $region61: #{tpu_custom_call.1} parent=5 // pred_check
        _
      $region62: #{tpu_custom_call.1} parent=5 // pred_check_branch
        %392 = sbr.rel (%p389) target = $region64
      $region63: #{tpu_custom_call.1} parent=5 // pred_region
        %s393 = ssub.s32 %s25, 1
        %p394 = scmp.lt.s32.totalorder %s30, 1
        %s395 = scalar_select %p394, %s30, 1
        %s396 = smul.addr %s395, 8
        %s397 = scalar_lea.vmem %s0, %s396
        %p398 = pneg %p51
        %p399 = pneg %p48
        %p400 = scmp.lt.s32.totalorder %s30, 1
        %s401 = scalar_select %p400, %s30, 1
        %s402 = smul.addr %s401, 8
        %s403 = scalar_lea.vmem %s1, %s402
        %p404 = pneg %p77
        %p405 = pneg %p74
        %p406 = scmp.lt.s32.totalorder %s30, 1
        %s407 = scalar_select %p406, %s30, 1
        %s408 = smul.addr %s407, 8
        %s409 = scalar_lea.vmem %s2, %s408
        %p410 = pneg %p103
        %p411 = pneg %p100
        %p412 = pneg %p124
        %p413 = pneg %p121
        %p414 = pneg %p145
        %p415 = pneg %p142
        %p416 = pneg %p166
        %p417 = pneg %p163
        %p418 = pneg %p187
        %p419 = pneg %p184
        %p420 = pneg %p208
        %p421 = pneg %p205
        %p422 = pneg %p229
        %p423 = pneg %p226
        %p424 = pneg %p250
        %p425 = pneg %p247
        %p426 = pneg %p271
        %p427 = pneg %p268
        %p428 = pneg %p297
        %p429 = pneg %p294
        %s430 = sand.u32 %s284, 1
        %s431 = scalar_lea.sflag [#allocation3], %s430
        %s432 = sand.u32 %s284, 1
        %s433 = smul.addr %s432, 8
        %s434 = scalar_lea.vmem [#allocation2], %s433
        %p435 = pneg %p323
        %p436 = pneg %p320
        %s437 = sand.u32 %s310, 1
        %s438 = scalar_lea.sflag [#allocation5], %s437
        %s439 = sand.u32 %s310, 1
        %s440 = smul.addr %s439, 32
        %s441 = scalar_lea.vmem [#allocation4], %s440
        %p442 = scmp.lt.s32.totalorder %s30, 1
        %s443 = scalar_select %p442, %s30, 1
        %s444 = smul.addr %s443, 8
        %s445 = scalar_lea.vmem %s0, %s444
        %p446 = scmp.lt.s32.totalorder %s30, 1
        %s447 = scalar_select %p446, %s30, 1
        %s448 = smul.addr %s447, 8
        %s449 = scalar_lea.vmem %s1, %s448
        %p450 = scmp.lt.s32.totalorder %s30, 1
        %s451 = scalar_select %p450, %s30, 1
        %s452 = smul.addr %s451, 8
        %s453 = scalar_lea.vmem %s2, %s452
        %v454 = vld [vmem:[%s445] sm:$0xff]
        %v455 = vld [vmem:[%s449] sm:$0xff]
        %v456 = vld [vmem:[%s453] sm:$0xff]
        %v457 = vld [vmem:[%s3] sm:$0xff]
        %v458 = vld [vmem:[%s3 + $0x8] sm:$0xff]
        %v459 = vld [vmem:[%s3 + $0x10] sm:$0xff]
        %v460 = vld [vmem:[%s3 + $0x18] sm:$0xff]
        %v461 = vld [vmem:[%s3 + $0x20] sm:$0xff]
        %v462 = vld [vmem:[%s3 + $0x28] sm:$0xff]
        %v463 = vld [vmem:[%s3 + $0x30] sm:$0xff]
        %v464 = vld [vmem:[%s3 + $0x38] sm:$0xff]
        %v465 = vld [vmem:[%s3 + $0x40] sm:$0xff]
        %v466 = vld [vmem:[%s3 + $0x48] sm:$0xff]
        %v467 = vld [vmem:[%s3 + $0x50] sm:$0xff]
        %v468 = vld [vmem:[%s3 + $0x58] sm:$0xff]
        %v469 = vld [vmem:[%s3 + $0x60] sm:$0xff]
        %v470 = vld [vmem:[%s3 + $0x68] sm:$0xff]
        %v471 = vld [vmem:[%s3 + $0x70] sm:$0xff]
        %v472 = vld [vmem:[%s3 + $0x78] sm:$0xff]
        %v473 = vld [vmem:[%s4] sm:$0x1]
        %v474 = vld [vmem:[%s4 + $0x1] sm:$0x1]
        %v475 = vld [vmem:[%s4 + $0x2] sm:$0x1]
        %v476 = vld [vmem:[%s4 + $0x3] sm:$0x1]
        %v481 = vperm.slane %v473, 0
        %v482 = vperm.slane %v474, 0
        %v483 = vperm.slane %v475, 0
        %v484 = vperm.slane %v476, 0
        %vm489 = vcmask 261120
        %v491 = vsel %vm489, %v454, 0
        %493 = vmatpush.msra.mxu0 0.0
        %494 = vmatpush.msra.mxu0 0.0
        %495 = vmatpush.msra.mxu0 0.0
        %496 = vmatpush.msra.mxu0 0.0
        %497 = vmatpush.msra.mxu0 0.0
        %498 = vmatpush.msra.mxu0 0.0
        %499 = vmatpush.msra.mxu0 0.0
        %500 = vmatpush.msra.mxu0 0.0
        %501 = vmatpush.msra.mxu0 0.0
        %502 = vmatpush.msra.mxu0 0.0
        %503 = vmatpush.msra.mxu0 0.0
        %504 = vmatpush.msra.mxu0 0.0
        %505 = vmatpush.msra.mxu0 %v460
        %506 = vmatpush.msra.mxu0 %v459
        %507 = vmatpush.msra.mxu0 %v458
        %508 = vmatpush.msra.mxu0 %v457
        %509 = vmatmul.f32.gmra.mxu0 %v491
        %v510 = vpop.f32.mrf.mxu0
        %v511 = vadd.f32 %v481, %v510
        %512 = vdwg.mxu0
        %513 = vmatpush.msra.mxu0 0.0
        %514 = vmatpush.msra.mxu0 0.0
        %515 = vmatpush.msra.mxu0 0.0
        %516 = vmatpush.msra.mxu0 0.0
        %517 = vmatpush.msra.mxu0 0.0
        %518 = vmatpush.msra.mxu0 0.0
        %519 = vmatpush.msra.mxu0 0.0
        %520 = vmatpush.msra.mxu0 0.0
        %521 = vmatpush.msra.mxu0 0.0
        %522 = vmatpush.msra.mxu0 0.0
        %523 = vmatpush.msra.mxu0 0.0
        %524 = vmatpush.msra.mxu0 0.0
        %525 = vmatpush.msra.mxu0 %v464
        %526 = vmatpush.msra.mxu0 %v463
        %527 = vmatpush.msra.mxu0 %v462
        %528 = vmatpush.msra.mxu0 %v461
        %529 = vmatmul.f32.gmra.mxu0 %v491
        %v530 = vpop.f32.mrf.mxu0
        %v531 = vadd.f32 %v482, %v530
        %532 = vdwg.mxu0
        %533 = vmatpush.msra.mxu0 0.0
        %534 = vmatpush.msra.mxu0 0.0
        %535 = vmatpush.msra.mxu0 0.0
        %536 = vmatpush.msra.mxu0 0.0
        %537 = vmatpush.msra.mxu0 0.0
        %538 = vmatpush.msra.mxu0 0.0
        %539 = vmatpush.msra.mxu0 0.0
        %540 = vmatpush.msra.mxu0 0.0
        %541 = vmatpush.msra.mxu0 0.0
        %542 = vmatpush.msra.mxu0 0.0
        %543 = vmatpush.msra.mxu0 0.0
        %544 = vmatpush.msra.mxu0 0.0
        %545 = vmatpush.msra.mxu0 %v468
        %546 = vmatpush.msra.mxu0 %v467
        %547 = vmatpush.msra.mxu0 %v466
        %548 = vmatpush.msra.mxu0 %v465
        %549 = vmatmul.f32.gmra.mxu0 %v491
        %v550 = vpop.f32.mrf.mxu0
        %v551 = vadd.f32 %v483, %v550
        %552 = vdwg.mxu0
        %553 = vmatpush.msra.mxu0 0.0
        %554 = vmatpush.msra.mxu0 0.0
        %555 = vmatpush.msra.mxu0 0.0
        %556 = vmatpush.msra.mxu0 0.0
        %557 = vmatpush.msra.mxu0 0.0
        %558 = vmatpush.msra.mxu0 0.0
        %559 = vmatpush.msra.mxu0 0.0
        %560 = vmatpush.msra.mxu0 0.0
        %561 = vmatpush.msra.mxu0 0.0
        %562 = vmatpush.msra.mxu0 0.0
        %563 = vmatpush.msra.mxu0 0.0
        %564 = vmatpush.msra.mxu0 0.0
        %565 = vmatpush.msra.mxu0 %v472
        %566 = vmatpush.msra.mxu0 %v471
        %567 = vmatpush.msra.mxu0 %v470
        %568 = vmatpush.msra.mxu0 %v469
        %569 = vmatmul.f32.gmra.mxu0 %v491
        %v570 = vpop.f32.mrf.mxu0
        %v571 = vadd.f32 %v484, %v570
        %572 = vdwg.mxu0
        %v573 = vld [vmem:[%s5] sm:$0xff]
        %v574 = vld [vmem:[%s5 + $0x8] sm:$0xff]
        %v575 = vld [vmem:[%s5 + $0x10] sm:$0xff]
        %v576 = vld [vmem:[%s5 + $0x18] sm:$0xff]
        %v577 = vld [vmem:[%s5 + $0x20] sm:$0xff]
        %v578 = vld [vmem:[%s5 + $0x28] sm:$0xff]
        %v579 = vld [vmem:[%s5 + $0x30] sm:$0xff]
        %v580 = vld [vmem:[%s5 + $0x38] sm:$0xff]
        %v581 = vld [vmem:[%s5 + $0x40] sm:$0xff]
        %v582 = vld [vmem:[%s5 + $0x48] sm:$0xff]
        %v583 = vld [vmem:[%s5 + $0x50] sm:$0xff]
        %v584 = vld [vmem:[%s5 + $0x58] sm:$0xff]
        %v585 = vld [vmem:[%s5 + $0x60] sm:$0xff]
        %v586 = vld [vmem:[%s5 + $0x68] sm:$0xff]
        %v587 = vld [vmem:[%s5 + $0x70] sm:$0xff]
        %v588 = vld [vmem:[%s5 + $0x78] sm:$0xff]
        %v589 = vld [vmem:[%s6] sm:$0x1]
        %v590 = vld [vmem:[%s6 + $0x1] sm:$0x1]
        %v591 = vld [vmem:[%s6 + $0x2] sm:$0x1]
        %v592 = vld [vmem:[%s6 + $0x3] sm:$0x1]
        %v597 = vperm.slane %v589, 0
        %v598 = vperm.slane %v590, 0
        %v599 = vperm.slane %v591, 0
        %v600 = vperm.slane %v592, 0
        %v606 = vsel %vm489, %v455, 0
        %608 = vmatpush.msra.mxu0 0.0
        %609 = vmatpush.msra.mxu0 0.0
        %610 = vmatpush.msra.mxu0 0.0
        %611 = vmatpush.msra.mxu0 0.0
        %612 = vmatpush.msra.mxu0 0.0
        %613 = vmatpush.msra.mxu0 0.0
        %614 = vmatpush.msra.mxu0 0.0
        %615 = vmatpush.msra.mxu0 0.0
        %616 = vmatpush.msra.mxu0 0.0
        %617 = vmatpush.msra.mxu0 0.0
        %618 = vmatpush.msra.mxu0 0.0
        %619 = vmatpush.msra.mxu0 0.0
        %620 = vmatpush.msra.mxu0 %v576
        %621 = vmatpush.msra.mxu0 %v575
        %622 = vmatpush.msra.mxu0 %v574
        %623 = vmatpush.msra.mxu0 %v573
        %624 = vmatmul.f32.gmra.mxu0 %v606
        %v625 = vpop.f32.mrf.mxu0
        %v626 = vadd.f32 %v597, %v625
        %627 = vdwg.mxu0
        %628 = vmatpush.msra.mxu0 0.0
        %629 = vmatpush.msra.mxu0 0.0
        %630 = vmatpush.msra.mxu0 0.0
        %631 = vmatpush.msra.mxu0 0.0
        %632 = vmatpush.msra.mxu0 0.0
        %633 = vmatpush.msra.mxu0 0.0
        %634 = vmatpush.msra.mxu0 0.0
        %635 = vmatpush.msra.mxu0 0.0
        %636 = vmatpush.msra.mxu0 0.0
        %637 = vmatpush.msra.mxu0 0.0
        %638 = vmatpush.msra.mxu0 0.0
        %639 = vmatpush.msra.mxu0 0.0
        %640 = vmatpush.msra.mxu0 %v580
        %641 = vmatpush.msra.mxu0 %v579
        %642 = vmatpush.msra.mxu0 %v578
        %643 = vmatpush.msra.mxu0 %v577
        %644 = vmatmul.f32.gmra.mxu0 %v606
        %v645 = vpop.f32.mrf.mxu0
        %v646 = vadd.f32 %v598, %v645
        %647 = vdwg.mxu0
        %648 = vmatpush.msra.mxu0 0.0
        %649 = vmatpush.msra.mxu0 0.0
        %650 = vmatpush.msra.mxu0 0.0
        %651 = vmatpush.msra.mxu0 0.0
        %652 = vmatpush.msra.mxu0 0.0
        %653 = vmatpush.msra.mxu0 0.0
        %654 = vmatpush.msra.mxu0 0.0
        %655 = vmatpush.msra.mxu0 0.0
        %656 = vmatpush.msra.mxu0 0.0
        %657 = vmatpush.msra.mxu0 0.0
        %658 = vmatpush.msra.mxu0 0.0
        %659 = vmatpush.msra.mxu0 0.0
        %660 = vmatpush.msra.mxu0 %v584
        %661 = vmatpush.msra.mxu0 %v583
        %662 = vmatpush.msra.mxu0 %v582
        %663 = vmatpush.msra.mxu0 %v581
        %664 = vmatmul.f32.gmra.mxu0 %v606
        %v665 = vpop.f32.mrf.mxu0
        %v666 = vadd.f32 %v599, %v665
        %667 = vdwg.mxu0
        %668 = vmatpush.msra.mxu0 0.0
        %669 = vmatpush.msra.mxu0 0.0
        %670 = vmatpush.msra.mxu0 0.0
        %671 = vmatpush.msra.mxu0 0.0
        %672 = vmatpush.msra.mxu0 0.0
        %673 = vmatpush.msra.mxu0 0.0
        %674 = vmatpush.msra.mxu0 0.0
        %675 = vmatpush.msra.mxu0 0.0
        %676 = vmatpush.msra.mxu0 0.0
        %677 = vmatpush.msra.mxu0 0.0
        %678 = vmatpush.msra.mxu0 0.0
        %679 = vmatpush.msra.mxu0 0.0
        %680 = vmatpush.msra.mxu0 %v588
        %681 = vmatpush.msra.mxu0 %v587
        %682 = vmatpush.msra.mxu0 %v586
        %683 = vmatpush.msra.mxu0 %v585
        %684 = vmatmul.f32.gmra.mxu0 %v606
        %v685 = vpop.f32.mrf.mxu0
        %v686 = vadd.f32 %v600, %v685
        %687 = vdwg.mxu0
        %v688 = vld [vmem:[%s7] sm:$0xff]
        %v689 = vld [vmem:[%s7 + $0x8] sm:$0xff]
        %v690 = vld [vmem:[%s7 + $0x10] sm:$0xff]
        %v691 = vld [vmem:[%s7 + $0x18] sm:$0xff]
        %v692 = vld [vmem:[%s7 + $0x20] sm:$0xff]
        %v693 = vld [vmem:[%s7 + $0x28] sm:$0xff]
        %v694 = vld [vmem:[%s7 + $0x30] sm:$0xff]
        %v695 = vld [vmem:[%s7 + $0x38] sm:$0xff]
        %v696 = vld [vmem:[%s7 + $0x40] sm:$0xff]
        %v697 = vld [vmem:[%s7 + $0x48] sm:$0xff]
        %v698 = vld [vmem:[%s7 + $0x50] sm:$0xff]
        %v699 = vld [vmem:[%s7 + $0x58] sm:$0xff]
        %v700 = vld [vmem:[%s7 + $0x60] sm:$0xff]
        %v701 = vld [vmem:[%s7 + $0x68] sm:$0xff]
        %v702 = vld [vmem:[%s7 + $0x70] sm:$0xff]
        %v703 = vld [vmem:[%s7 + $0x78] sm:$0xff]
        %v704 = vld [vmem:[%s8] sm:$0x1]
        %v705 = vld [vmem:[%s8 + $0x1] sm:$0x1]
        %v706 = vld [vmem:[%s8 + $0x2] sm:$0x1]
        %v707 = vld [vmem:[%s8 + $0x3] sm:$0x1]
        %v712 = vperm.slane %v704, 0
        %v713 = vperm.slane %v705, 0
        %v714 = vperm.slane %v706, 0
        %v715 = vperm.slane %v707, 0
        %v721 = vsel %vm489, %v456, 0
        %723 = vmatpush.msra.mxu0 0.0
        %724 = vmatpush.msra.mxu0 0.0
        %725 = vmatpush.msra.mxu0 0.0
        %726 = vmatpush.msra.mxu0 0.0
        %727 = vmatpush.msra.mxu0 0.0
        %728 = vmatpush.msra.mxu0 0.0
        %729 = vmatpush.msra.mxu0 0.0
        %730 = vmatpush.msra.mxu0 0.0
        %731 = vmatpush.msra.mxu0 0.0
        %732 = vmatpush.msra.mxu0 0.0
        %733 = vmatpush.msra.mxu0 0.0
        %734 = vmatpush.msra.mxu0 0.0
        %735 = vmatpush.msra.mxu0 %v691
        %736 = vmatpush.msra.mxu0 %v690
        %737 = vmatpush.msra.mxu0 %v689
        %738 = vmatpush.msra.mxu0 %v688
        %739 = vmatmul.f32.gmra.mxu0 %v721
        %v740 = vpop.f32.mrf.mxu0
        %v741 = vadd.f32 %v712, %v740
        %742 = vdwg.mxu0
        %743 = vmatpush.msra.mxu0 0.0
        %744 = vmatpush.msra.mxu0 0.0
        %745 = vmatpush.msra.mxu0 0.0
        %746 = vmatpush.msra.mxu0 0.0
        %747 = vmatpush.msra.mxu0 0.0
        %748 = vmatpush.msra.mxu0 0.0
        %749 = vmatpush.msra.mxu0 0.0
        %750 = vmatpush.msra.mxu0 0.0
        %751 = vmatpush.msra.mxu0 0.0
        %752 = vmatpush.msra.mxu0 0.0
        %753 = vmatpush.msra.mxu0 0.0
        %754 = vmatpush.msra.mxu0 0.0
        %755 = vmatpush.msra.mxu0 %v695
        %756 = vmatpush.msra.mxu0 %v694
        %757 = vmatpush.msra.mxu0 %v693
        %758 = vmatpush.msra.mxu0 %v692
        %759 = vmatmul.f32.gmra.mxu0 %v721
        %v760 = vpop.f32.mrf.mxu0
        %v761 = vadd.f32 %v713, %v760
        %762 = vdwg.mxu0
        %763 = vmatpush.msra.mxu0 0.0
        %764 = vmatpush.msra.mxu0 0.0
        %765 = vmatpush.msra.mxu0 0.0
        %766 = vmatpush.msra.mxu0 0.0
        %767 = vmatpush.msra.mxu0 0.0
        %768 = vmatpush.msra.mxu0 0.0
        %769 = vmatpush.msra.mxu0 0.0
        %770 = vmatpush.msra.mxu0 0.0
        %771 = vmatpush.msra.mxu0 0.0
        %772 = vmatpush.msra.mxu0 0.0
        %773 = vmatpush.msra.mxu0 0.0
        %774 = vmatpush.msra.mxu0 0.0
        %775 = vmatpush.msra.mxu0 %v699
        %776 = vmatpush.msra.mxu0 %v698
        %777 = vmatpush.msra.mxu0 %v697
        %778 = vmatpush.msra.mxu0 %v696
        %779 = vmatmul.f32.gmra.mxu0 %v721
        %v780 = vpop.f32.mrf.mxu0
        %v781 = vadd.f32 %v714, %v780
        %782 = vdwg.mxu0
        %783 = vmatpush.msra.mxu0 0.0
        %784 = vmatpush.msra.mxu0 0.0
        %785 = vmatpush.msra.mxu0 0.0
        %786 = vmatpush.msra.mxu0 0.0
        %787 = vmatpush.msra.mxu0 0.0
        %788 = vmatpush.msra.mxu0 0.0
        %789 = vmatpush.msra.mxu0 0.0
        %790 = vmatpush.msra.mxu0 0.0
        %791 = vmatpush.msra.mxu0 0.0
        %792 = vmatpush.msra.mxu0 0.0
        %793 = vmatpush.msra.mxu0 0.0
        %794 = vmatpush.msra.mxu0 0.0
        %795 = vmatpush.msra.mxu0 %v703
        %796 = vmatpush.msra.mxu0 %v702
        %797 = vmatpush.msra.mxu0 %v701
        %798 = vmatpush.msra.mxu0 %v700
        %799 = vmatmul.f32.gmra.mxu0 %v721
        %v800 = vpop.f32.mrf.mxu0
        %v801 = vadd.f32 %v715, %v800
        %802 = vdwg.mxu0
        %vm803 = vcmask 64512
        %v805 = vsel %vm803, %v511, 0
        %v808 = vsel %vm803, %v626, 0
        %810 = vmatpush.xpose.msra.mxu0 0.0
        %811 = vmatpush.xpose.msra.mxu0 0.0
        %812 = vmatpush.xpose.msra.mxu0 0.0
        %813 = vmatpush.xpose.msra.mxu0 0.0
        %814 = vmatpush.xpose.msra.mxu0 0.0
        %815 = vmatpush.xpose.msra.mxu0 0.0
        %816 = vmatpush.xpose.msra.mxu0 0.0
        %817 = vmatpush.xpose.msra.mxu0 0.0
        %818 = vmatpush.xpose.msra.mxu0 0.0
        %819 = vmatpush.xpose.msra.mxu0 0.0
        %820 = vmatpush.xpose.msra.mxu0 0.0
        %821 = vmatpush.xpose.msra.mxu0 0.0
        %822 = vmatpush.xpose.msra.mxu0 0.0
        %823 = vmatpush.xpose.msra.mxu0 0.0
        %824 = vmatpush.xpose.msra.mxu0 0.0
        %825 = vmatpush.xpose.msra.mxu0 %v808
        %826 = vmatmul.f32.gmra.mxu0 %v805
        %v827 = vpop.f32.mrf.mxu0
        %v828 = vadd.f32 0.0, %v827
        %829 = vdwg.mxu0
        %v831 = vsel %vm803, %v531, 0
        %v834 = vsel %vm803, %v646, 0
        %836 = vmatpush.xpose.msra.mxu0 0.0
        %837 = vmatpush.xpose.msra.mxu0 0.0
        %838 = vmatpush.xpose.msra.mxu0 0.0
        %839 = vmatpush.xpose.msra.mxu0 0.0
        %840 = vmatpush.xpose.msra.mxu0 0.0
        %841 = vmatpush.xpose.msra.mxu0 0.0
        %842 = vmatpush.xpose.msra.mxu0 0.0
        %843 = vmatpush.xpose.msra.mxu0 0.0
        %844 = vmatpush.xpose.msra.mxu0 0.0
        %845 = vmatpush.xpose.msra.mxu0 0.0
        %846 = vmatpush.xpose.msra.mxu0 0.0
        %847 = vmatpush.xpose.msra.mxu0 0.0
        %848 = vmatpush.xpose.msra.mxu0 0.0
        %849 = vmatpush.xpose.msra.mxu0 0.0
        %850 = vmatpush.xpose.msra.mxu0 0.0
        %851 = vmatpush.xpose.msra.mxu0 %v834
        %852 = vmatmul.f32.gmra.mxu0 %v831
        %v853 = vpop.f32.mrf.mxu0
        %v854 = vadd.f32 0.0, %v853
        %855 = vdwg.mxu0
        %v857 = vsel %vm803, %v551, 0
        %v860 = vsel %vm803, %v666, 0
        %862 = vmatpush.xpose.msra.mxu0 0.0
        %863 = vmatpush.xpose.msra.mxu0 0.0
        %864 = vmatpush.xpose.msra.mxu0 0.0
        %865 = vmatpush.xpose.msra.mxu0 0.0
        %866 = vmatpush.xpose.msra.mxu0 0.0
        %867 = vmatpush.xpose.msra.mxu0 0.0
        %868 = vmatpush.xpose.msra.mxu0 0.0
        %869 = vmatpush.xpose.msra.mxu0 0.0
        %870 = vmatpush.xpose.msra.mxu0 0.0
        %871 = vmatpush.xpose.msra.mxu0 0.0
        %872 = vmatpush.xpose.msra.mxu0 0.0
        %873 = vmatpush.xpose.msra.mxu0 0.0
        %874 = vmatpush.xpose.msra.mxu0 0.0
        %875 = vmatpush.xpose.msra.mxu0 0.0
        %876 = vmatpush.xpose.msra.mxu0 0.0
        %877 = vmatpush.xpose.msra.mxu0 %v860
        %878 = vmatmul.f32.gmra.mxu0 %v857
        %v879 = vpop.f32.mrf.mxu0
        %v880 = vadd.f32 0.0, %v879
        %881 = vdwg.mxu0
        %v883 = vsel %vm803, %v571, 0
        %v886 = vsel %vm803, %v686, 0
        %888 = vmatpush.xpose.msra.mxu0 0.0
        %889 = vmatpush.xpose.msra.mxu0 0.0
        %890 = vmatpush.xpose.msra.mxu0 0.0
        %891 = vmatpush.xpose.msra.mxu0 0.0
        %892 = vmatpush.xpose.msra.mxu0 0.0
        %893 = vmatpush.xpose.msra.mxu0 0.0
        %894 = vmatpush.xpose.msra.mxu0 0.0
        %895 = vmatpush.xpose.msra.mxu0 0.0
        %896 = vmatpush.xpose.msra.mxu0 0.0
        %897 = vmatpush.xpose.msra.mxu0 0.0
        %898 = vmatpush.xpose.msra.mxu0 0.0
        %899 = vmatpush.xpose.msra.mxu0 0.0
        %900 = vmatpush.xpose.msra.mxu0 0.0
        %901 = vmatpush.xpose.msra.mxu0 0.0
        %902 = vmatpush.xpose.msra.mxu0 0.0
        %903 = vmatpush.xpose.msra.mxu0 %v886
        %904 = vmatmul.f32.gmra.mxu0 %v883
        %v905 = vpop.f32.mrf.mxu0
        %v906 = vadd.f32 0.0, %v905
        %907 = vdwg.mxu0
        %908 = vst.msk [vmem:[%s441] sm:$0xff] %vm803, %v828
        %909 = vst.msk [vmem:[%s441 + $0x8] sm:$0xff] %vm803, %v854
        %910 = vst.msk [vmem:[%s441 + $0x10] sm:$0xff] %vm803, %v880
        %911 = vst.msk [vmem:[%s441 + $0x18] sm:$0xff] %vm803, %v906
        %v912 = vsel %vm803, %v828, -inf
        %913 = vmax.xlane.f32.xlu0 %v912
        %v914 = vpop.xlane.xlu0 %913
        %v915 = vsel %vm803, %v854, -inf
        %916 = vmax.xlane.f32.xlu0 %v915
        %v917 = vpop.xlane.xlu0 %916
        %v918 = vsel %vm803, %v880, -inf
        %919 = vmax.xlane.f32.xlu0 %v918
        %v920 = vpop.xlane.xlu0 %919
        %v921 = vsel %vm803, %v906, -inf
        %922 = vmax.xlane.f32.xlu0 %v921
        %v923 = vpop.xlane.xlu0 %922
        %v924 = vsub.f32 %v828, %v914
        %v925 = vsub.f32 %v854, %v917
        %v926 = vsub.f32 %v880, %v920
        %v927 = vsub.f32 %v906, %v923
        %v928 = vmul.f32 %v924, 1.442695
        %v929 = vpow.pop %v928
        %v930 = vmul.f32 %v925, 1.442695
        %v931 = vpow.pop %v930
        %v932 = vmul.f32 %v926, 1.442695
        %v933 = vpow.pop %v932
        %v934 = vmul.f32 %v927, 1.442695
        %v935 = vpow.pop %v934
        %v936 = vsel %vm803, %v929, 0.0
        %937 = vadd.xlane.f32.xlu0 %v936
        %v938 = vpop.xlane.xlu0 %937
        %v939 = vsel %vm803, %v931, 0.0
        %940 = vadd.xlane.f32.xlu0 %v939
        %v941 = vpop.xlane.xlu0 %940
        %v942 = vsel %vm803, %v933, 0.0
        %943 = vadd.xlane.f32.xlu0 %v942
        %v944 = vpop.xlane.xlu0 %943
        %v945 = vsel %vm803, %v935, 0.0
        %946 = vadd.xlane.f32.xlu0 %v945
        %v947 = vpop.xlane.xlu0 %946
        %v949 = vsel %vm803, %v929, 0
        %951 = vmatpush.msra.mxu0 0.0
        %952 = vmatpush.msra.mxu0 0.0
        %953 = vmatpush.msra.mxu0 0.0
        %954 = vmatpush.msra.mxu0 0.0
        %955 = vmatpush.msra.mxu0 0.0
        %956 = vmatpush.msra.mxu0 0.0
        %957 = vmatpush.msra.mxu0 0.0
        %958 = vmatpush.msra.mxu0 0.0
        %959 = vmatpush.msra.mxu0 0.0
        %960 = vmatpush.msra.mxu0 0.0
        %961 = vmatpush.msra.mxu0 0.0
        %962 = vmatpush.msra.mxu0 0.0
        %963 = vmatpush.msra.mxu0 0.0
        %964 = vmatpush.msra.mxu0 0.0
        %965 = vmatpush.msra.mxu0 0.0
        %966 = vmatpush.msra.mxu0 %v741
        %967 = vmatmul.f32.gmra.mxu0 %v949
        %v968 = vpop.f32.mrf.mxu0
        %v969 = vadd.f32 0.0, %v968
        %970 = vdwg.mxu0
        %v972 = vsel %vm803, %v931, 0
        %974 = vmatpush.msra.mxu0 0.0
        %975 = vmatpush.msra.mxu0 0.0
        %976 = vmatpush.msra.mxu0 0.0
        %977 = vmatpush.msra.mxu0 0.0
        %978 = vmatpush.msra.mxu0 0.0
        %979 = vmatpush.msra.mxu0 0.0
        %980 = vmatpush.msra.mxu0 0.0
        %981 = vmatpush.msra.mxu0 0.0
        %982 = vmatpush.msra.mxu0 0.0
        %983 = vmatpush.msra.mxu0 0.0
        %984 = vmatpush.msra.mxu0 0.0
        %985 = vmatpush.msra.mxu0 0.0
        %986 = vmatpush.msra.mxu0 0.0
        %987 = vmatpush.msra.mxu0 0.0
        %988 = vmatpush.msra.mxu0 0.0
        %989 = vmatpush.msra.mxu0 %v761
        %990 = vmatmul.f32.gmra.mxu0 %v972
        %v991 = vpop.f32.mrf.mxu0
        %v992 = vadd.f32 0.0, %v991
        %993 = vdwg.mxu0
        %v995 = vsel %vm803, %v933, 0
        %997 = vmatpush.msra.mxu0 0.0
        %998 = vmatpush.msra.mxu0 0.0
        %999 = vmatpush.msra.mxu0 0.0
        %1000 = vmatpush.msra.mxu0 0.0
        %1001 = vmatpush.msra.mxu0 0.0
        %1002 = vmatpush.msra.mxu0 0.0
        %1003 = vmatpush.msra.mxu0 0.0
        %1004 = vmatpush.msra.mxu0 0.0
        %1005 = vmatpush.msra.mxu0 0.0
        %1006 = vmatpush.msra.mxu0 0.0
        %1007 = vmatpush.msra.mxu0 0.0
        %1008 = vmatpush.msra.mxu0 0.0
        %1009 = vmatpush.msra.mxu0 0.0
        %1010 = vmatpush.msra.mxu0 0.0
        %1011 = vmatpush.msra.mxu0 0.0
        %1012 = vmatpush.msra.mxu0 %v781
        %1013 = vmatmul.f32.gmra.mxu0 %v995
        %v1014 = vpop.f32.mrf.mxu0
        %v1015 = vadd.f32 0.0, %v1014
        %1016 = vdwg.mxu0
        %v1018 = vsel %vm803, %v935, 0
        %1020 = vmatpush.msra.mxu0 0.0
        %1021 = vmatpush.msra.mxu0 0.0
        %1022 = vmatpush.msra.mxu0 0.0
        %1023 = vmatpush.msra.mxu0 0.0
        %1024 = vmatpush.msra.mxu0 0.0
        %1025 = vmatpush.msra.mxu0 0.0
        %1026 = vmatpush.msra.mxu0 0.0
        %1027 = vmatpush.msra.mxu0 0.0
        %1028 = vmatpush.msra.mxu0 0.0
        %1029 = vmatpush.msra.mxu0 0.0
        %1030 = vmatpush.msra.mxu0 0.0
        %1031 = vmatpush.msra.mxu0 0.0
        %1032 = vmatpush.msra.mxu0 0.0
        %1033 = vmatpush.msra.mxu0 0.0
        %1034 = vmatpush.msra.mxu0 0.0
        %1035 = vmatpush.msra.mxu0 %v801
        %1036 = vmatmul.f32.gmra.mxu0 %v1018
        %v1037 = vpop.f32.mrf.mxu0
        %v1038 = vadd.f32 0.0, %v1037
        %1039 = vdwg.mxu0
        %v1040 = vrcp.pop %v938
        %v1041 = vrcp.pop %v941
        %v1042 = vrcp.pop %v944
        %v1043 = vrcp.pop %v947
        %v1044 = vmul.f32 %v969, %v1040
        %v1045 = vmul.f32 %v992, %v1041
        %v1046 = vmul.f32 %v1015, %v1042
        %v1047 = vmul.f32 %v1038, %v1043
        %v1048 = vld [vmem:[%s9] sm:$0xff]
        %v1049 = vld [vmem:[%s9 + $0x8] sm:$0xff]
        %v1050 = vld [vmem:[%s9 + $0x10] sm:$0xff]
        %v1051 = vld [vmem:[%s9 + $0x18] sm:$0xff]
        %v1053 = vsel %vm803, %v1044, 0
        %1055 = vmatpush.msra.mxu0 0.0
        %1056 = vmatpush.msra.mxu0 0.0
        %1057 = vmatpush.msra.mxu0 0.0
        %1058 = vmatpush.msra.mxu0 0.0
        %1059 = vmatpush.msra.mxu0 0.0
        %1060 = vmatpush.msra.mxu0 0.0
        %1061 = vmatpush.msra.mxu0 0.0
        %1062 = vmatpush.msra.mxu0 0.0
        %1063 = vmatpush.msra.mxu0 0.0
        %1064 = vmatpush.msra.mxu0 0.0
        %1065 = vmatpush.msra.mxu0 0.0
        %1066 = vmatpush.msra.mxu0 0.0
        %1067 = vmatpush.msra.mxu0 0.0
        %1068 = vmatpush.msra.mxu0 0.0
        %1069 = vmatpush.msra.mxu0 0.0
        %1070 = vmatpush.msra.mxu0 %v1048
        %1071 = vmatmul.f32.gmra.mxu0 %v1053
        %v1072 = vpop.f32.mrf.mxu0
        %v1073 = vadd.f32 0.0, %v1072
        %1074 = vdwg.mxu0
        %v1076 = vsel %vm803, %v1045, 0
        %1078 = vmatpush.msra.mxu0 0.0
        %1079 = vmatpush.msra.mxu0 0.0
        %1080 = vmatpush.msra.mxu0 0.0
        %1081 = vmatpush.msra.mxu0 0.0
        %1082 = vmatpush.msra.mxu0 0.0
        %1083 = vmatpush.msra.mxu0 0.0
        %1084 = vmatpush.msra.mxu0 0.0
        %1085 = vmatpush.msra.mxu0 0.0
        %1086 = vmatpush.msra.mxu0 0.0
        %1087 = vmatpush.msra.mxu0 0.0
        %1088 = vmatpush.msra.mxu0 0.0
        %1089 = vmatpush.msra.mxu0 0.0
        %1090 = vmatpush.msra.mxu0 0.0
        %1091 = vmatpush.msra.mxu0 0.0
        %1092 = vmatpush.msra.mxu0 0.0
        %1093 = vmatpush.msra.mxu0 %v1049
        %1094 = vmatmul.f32.gmra.mxu0 %v1076
        %v1095 = vpop.f32.mrf.mxu0
        %v1096 = vadd.f32 0.0, %v1095
        %1097 = vdwg.mxu0
        %v1099 = vsel %vm803, %v1046, 0
        %1101 = vmatpush.msra.mxu0 0.0
        %1102 = vmatpush.msra.mxu0 0.0
        %1103 = vmatpush.msra.mxu0 0.0
        %1104 = vmatpush.msra.mxu0 0.0
        %1105 = vmatpush.msra.mxu0 0.0
        %1106 = vmatpush.msra.mxu0 0.0
        %1107 = vmatpush.msra.mxu0 0.0
        %1108 = vmatpush.msra.mxu0 0.0
        %1109 = vmatpush.msra.mxu0 0.0
        %1110 = vmatpush.msra.mxu0 0.0
        %1111 = vmatpush.msra.mxu0 0.0
        %1112 = vmatpush.msra.mxu0 0.0
        %1113 = vmatpush.msra.mxu0 0.0
        %1114 = vmatpush.msra.mxu0 0.0
        %1115 = vmatpush.msra.mxu0 0.0
        %1116 = vmatpush.msra.mxu0 %v1050
        %1117 = vmatmul.f32.gmra.mxu0 %v1099
        %v1118 = vpop.f32.mrf.mxu0
        %v1119 = vadd.f32 0.0, %v1118
        %1120 = vdwg.mxu0
        %v1122 = vsel %vm803, %v1047, 0
        %1124 = vmatpush.msra.mxu0 0.0
        %1125 = vmatpush.msra.mxu0 0.0
        %1126 = vmatpush.msra.mxu0 0.0
        %1127 = vmatpush.msra.mxu0 0.0
        %1128 = vmatpush.msra.mxu0 0.0
        %1129 = vmatpush.msra.mxu0 0.0
        %1130 = vmatpush.msra.mxu0 0.0
        %1131 = vmatpush.msra.mxu0 0.0
        %1132 = vmatpush.msra.mxu0 0.0
        %1133 = vmatpush.msra.mxu0 0.0
        %1134 = vmatpush.msra.mxu0 0.0
        %1135 = vmatpush.msra.mxu0 0.0
        %1136 = vmatpush.msra.mxu0 0.0
        %1137 = vmatpush.msra.mxu0 0.0
        %1138 = vmatpush.msra.mxu0 0.0
        %1139 = vmatpush.msra.mxu0 %v1051
        %1140 = vmatmul.f32.gmra.mxu0 %v1122
        %v1141 = vpop.f32.mrf.mxu0
        %v1142 = vadd.f32 0.0, %v1141
        %1143 = vdwg.mxu0
        %v1144 = vsel %vm489, %v1073, 0.0
        %v1145 = vsel %vm489, %v1096, 0.0
        %v1146 = vadd.f32 %v1144, %v1145
        %v1147 = vsel %vm489, %v1119, 0.0
        %v1148 = vadd.f32 %v1146, %v1147
        %v1149 = vsel %vm489, %v1142, 0.0
        %v1150 = vadd.f32 %v1148, %v1149
        %v1151 = vld [vmem:[%s10] sm:$0x1]
        %v1153 = vperm.slane %v1151, 0
        %v1155 = vadd.f32 %v1150, %v1153
        %1156 = vst.msk [vmem:[%s434] sm:$0xff] %vm489, %v1155
        %s1157 = sand.u32 %s284, 1
        %s1158 = scalar_lea.sflag [#allocation3], %s1157
        %s1159 = sand.u32 %s284, 1
        %s1160 = smul.addr %s1159, 8
        %s1161 = scalar_lea.vmem [#allocation2], %s1160
        %s1162 = sand.u32 %s310, 1
        %s1163 = scalar_lea.sflag [#allocation5], %s1162
        %s1164 = sand.u32 %s310, 1
        %s1165 = smul.addr %s1164, 32
        %s1166 = scalar_lea.vmem [#allocation4], %s1165
        // Predicated region
        $region65: #{tpu_custom_call.1} parent=63 // pred_check
          %p1167 = pneg %p294
        $region66: #{tpu_custom_call.1} parent=63 // pred_check_branch
          %1169 = sbr.rel (%p1167) target = $region68
        $region67: #{tpu_custom_call.1} parent=63 // pred_region
          %1171 = vsyncadd %s1158, 0
          %s1172 = smul.addr %s30, 8
          %s1173 = scalar_lea.hbm %s11, %s1172
          %s1175 = sshll.u32 %s1161, 4
          %s1176 = int_to_ptr.vmem [resolvable:$true] %s1175
          %s1177 = sshll.u32 %s1173, 4
          %s1178 = int_to_ptr.hbm [resolvable:$true] %s1177
          %1180 = dma.vmem_to_hbm [thread:$0]  %s1176, 128, %s1178, %s1158
        $region68: #{tpu_custom_call.1} parent=63 // pred_fallthru
          _
        // Predicated region
        $region69: #{tpu_custom_call.1} parent=63 // pred_check
          %p1181 = pneg %p320
        $region70: #{tpu_custom_call.1} parent=63 // pred_check_branch
          %1183 = sbr.rel (%p1181) target = $region72
        $region71: #{tpu_custom_call.1} parent=63 // pred_region
          %1185 = vsyncadd %s1163, 0
          %s1186 = smul.addr %s30, 4
          %s1187 = smul.addr %s1186, 8
          %s1188 = scalar_lea.hbm %s12, %s1187
          %s1189 = sshll.u32 %s1166, 4
          %s1190 = int_to_ptr.vmem [resolvable:$true] %s1189
          %s1191 = sshll.u32 %s1188, 4
          %s1192 = int_to_ptr.hbm [resolvable:$true] %s1191
          %1197 = dma.vmem_to_hbm [thread:$0]  %s1190, 512, %s1192, %s1163, 128, 128, 8
        $region72: #{tpu_custom_call.1} parent=63 // pred_fallthru
          _
      $region64: #{tpu_custom_call.1} parent=5 // pred_fallthru
        _
      %p1198 = scmp.le.s32.totalorder 2, %s25
      // Predicated region
      $region73: #{tpu_custom_call.1} parent=5 // pred_check
        %p1199 = pneg %p1198
      $region74: #{tpu_custom_call.1} parent=5 // pred_check_branch
        %1201 = sbr.rel (%p1199) target = $region76
      $region75: #{tpu_custom_call.1} parent=5 // pred_region
        %s1202 = ssub.s32 %s25, 2
        // Predicated region
        $region77: #{tpu_custom_call.1} parent=75 // pred_check
          %p1203 = pneg %p300
        $region78: #{tpu_custom_call.1} parent=75 // pred_check_branch
          %1205 = sbr.rel (%p1203) target = $region80
        $region79: #{tpu_custom_call.1} parent=75 // pred_region
          %s1206 = sand.u32 %s285, 1
          %s1207 = scalar_lea.sflag [#allocation3], %s1206
          %s1208 = sand.u32 %s285, 1
          %s1209 = smul.addr %s1208, 8
          %s1210 = scalar_lea.vmem [#allocation2], %s1209
          %1212 = dma.done %s1207, 128
        $region80: #{tpu_custom_call.1} parent=75 // pred_fallthru
          _
        // Predicated region
        $region81: #{tpu_custom_call.1} parent=75 // pred_check
          %p1213 = pneg %p326
        $region82: #{tpu_custom_call.1} parent=75 // pred_check_branch
          %1215 = sbr.rel (%p1213) target = $region84
        $region83: #{tpu_custom_call.1} parent=75 // pred_region
          %s1216 = sand.u32 %s311, 1
          %s1217 = scalar_lea.sflag [#allocation5], %s1216
          %s1218 = sand.u32 %s311, 1
          %s1219 = smul.addr %s1218, 32
          %s1220 = scalar_lea.vmem [#allocation4], %s1219
          %1222 = dma.done %s1217, 512
        $region84: #{tpu_custom_call.1} parent=75 // pred_fallthru
          _
      $region76: #{tpu_custom_call.1} parent=5 // pred_fallthru
        _
    $region6: #{tpu_custom_call.1} parent=1 // loop_footer
      %s29 = sadd.s32 1, %s25
    $region7: #{tpu_custom_call.1} parent=1 // loop_footer_branch
      %24 = sbr.rel target = $region3
    $region8: #{tpu_custom_call.1} parent=1 // loop_exit
      _
    %1223 = vsyncpa [#allocation3], 1
    %s1224 = scalar_lea.sflag [#allocation3], 1
    %1225 = vsyncpa %s1224, 1
    %1226 = vsyncpa [#allocation5], 1
    %s1227 = scalar_lea.sflag [#allocation5], 1
    %1228 = vsyncpa %s1227, 1

</llo_original>
